<compile_context>
chip_gen: v6e
topology: v6e:2x2x1
jax: 0.10.0
libtpu: 0.0.40
codegen_flags: <defaults>
</compile_context>

<pallas_src>
import jax
import jax.numpy as jnp
from jax.experimental import pallas as pl
from jax.experimental.pallas import tpu as pltpu


def _round_up(n: int, m: int) -> int:
    return ((n + m - 1) // m) * m


# ---------------------------------------------------------------------------
# Kernel factory: 7 fused linears. Optionally runs two independent batch
# halves interleaved (LLO scheduler overlaps the two serial matmul chains).
# ---------------------------------------------------------------------------
def _make_kernel(split_halves: bool):
    def kernel(
        x_ref,
        w1_ref, b1_ref,      # Encoder_In
        w2_ref, b2_ref,      # Encoder_Hdd
        w3_ref, b3_ref,      # Encoder_Hdd2
        wm_ref, bm_ref,      # folded Encoder_out @ Koopman @ Decoder_In (+bias)
        w5_ref, b5_ref,      # Decoder_Hdd
        w6_ref, b6_ref,      # Decoder_Hdd2
        w7_ref, b7_ref,      # Decoder_out (lane-padded columns)
        o_ref,
    ):
        hidden = ((w1_ref, b1_ref), (w2_ref, b2_ref), (w3_ref, b3_ref),
                  (wm_ref, bm_ref), (w5_ref, b5_ref), (w6_ref, b6_ref))

        def layer(h, w_ref, b_ref):
            y = jnp.dot(h.astype(w_ref.dtype), w_ref[...],
                        preferred_element_type=jnp.float32)
            return jnp.maximum(y + b_ref[...], 0.0)

        def final(h, w_ref, b_ref):
            y = jnp.dot(h.astype(w_ref.dtype), w_ref[...],
                        preferred_element_type=jnp.float32)
            return (y + b_ref[...]).astype(o_ref.dtype)

        if split_halves:
            half = x_ref.shape[0] // 2          # static, multiple of 8
            ha = x_ref[:half, :]
            hb = x_ref[half:, :]
            for w_ref, b_ref in hidden:          # interleave the two chains
                ha = layer(ha, w_ref, b_ref)
                hb = layer(hb, w_ref, b_ref)
            o_ref[:half, :] = final(ha, w7_ref, b7_ref)
            o_ref[half:, :] = final(hb, w7_ref, b7_ref)
        else:
            h = x_ref[...]
            for w_ref, b_ref in hidden:
                h = layer(h, w_ref, b_ref)
            o_ref[...] = final(h, w7_ref, b7_ref)

    return kernel


# ---------------------------------------------------------------------------
# One-time parameter preparation (hoisted out of the hot path):
#   * fold Encoder_out @ Koopman @ Decoder_In (no nonlinearity between),
#   * zero-pad hidden width and output columns to lane multiples (exact in f32).
# ---------------------------------------------------------------------------
def prepare_params(params, *, weight_dtype=jnp.float32):
    (w_ei, b_ei, w_eh, b_eh, w_eh2, b_eh2, w_eo, b_eo,
     w_k,
     w_di, b_di, w_dh, b_dh, w_dh2, b_dh2, w_do, b_do) = params
    num_meas = w_ei.shape[0]
    num_neurons = w_ei.shape[1]
    n_pad = _round_up(num_neurons, 128)
    out_pad = _round_up(num_meas, 128)

    w_mid = w_eo @ w_k @ w_di                    # (num_neurons, num_neurons)
    b_mid = b_eo @ w_k @ w_di + b_di             # (1, num_neurons)

    def pad_w(w, rows, cols):
        buf = jnp.zeros((rows, cols), weight_dtype)
        return buf.at[: w.shape[0], : w.shape[1]].set(w.astype(weight_dtype))

    def pad_b(b, cols):
        buf = jnp.zeros((1, cols), weight_dtype)
        return buf.at[:, : b.shape[1]].set(b.astype(weight_dtype))

    prepared = (
        pad_w(w_ei, num_meas, n_pad), pad_b(b_ei, n_pad),
        pad_w(w_eh, n_pad, n_pad),    pad_b(b_eh, n_pad),
        pad_w(w_eh2, n_pad, n_pad),   pad_b(b_eh2, n_pad),
        pad_w(w_mid, n_pad, n_pad),   pad_b(b_mid, n_pad),
        pad_w(w_dh, n_pad, n_pad),    pad_b(b_dh, n_pad),
        pad_w(w_dh2, n_pad, n_pad),   pad_b(b_dh2, n_pad),
        pad_w(w_do, n_pad, out_pad),  pad_b(b_do, out_pad),
    )
    meta = dict(num_meas=num_meas, n_pad=n_pad, out_pad=out_pad)
    return prepared, meta


# ---------------------------------------------------------------------------
# Forward wrapper: grid over batch; weights stay VMEM-resident (constant
# index maps); batch tile chosen to bound padding waste and keep >= 2 steps.
# ---------------------------------------------------------------------------
def autoencoder_forward(x, prepared, meta, *, tile_b=512):
    B, num_meas = x.shape
    assert num_meas == meta["num_meas"]
    n_pad, out_pad = meta["n_pad"], meta["out_pad"]

    # --- batch tiling ---
    b8 = _round_up(B, 8)
    tb = min(int(tile_b), b8)
    if b8 >= 16:
        tb = min(tb, -(-b8 // 2))        # >= 2 grid steps: both v7x TCs get work
    tb = _round_up(tb, 8)
    b_pad = _round_up(b8, tb)            # waste bounded by < tb rows
    grid = (b_pad // tb,)
    split_halves = (tb >= 16) and (tb % 16 == 0)   # keep both halves 8-aligned

    x_p = x if b_pad == B else jnp.pad(x, ((0, b_pad - B), (0, 0)))

    in_specs = [pl.BlockSpec((tb, num_meas), lambda i: (i, 0))]
    for p in prepared:
        # Full-array block, constant index map -> VMEM-resident across grid.
        in_specs.append(pl.BlockSpec(p.shape, lambda i: (0, 0)))
    out_specs = pl.BlockSpec((tb, out_pad), lambda i: (i, 0))

    flops = 2 * b_pad * (num_meas * n_pad + 5 * n_pad * n_pad + n_pad * out_pad)
    bytes_accessed = (x_p.size * x_p.dtype.itemsize
                      + b_pad * out_pad * 4
                      + sum(int(p.size) * p.dtype.itemsize for p in prepared))
    cost = pl.CostEstimate(flops=flops, transcendentals=0,
                           bytes_accessed=bytes_accessed)

    # Generous scoped-VMEM budget, never below the 32 MiB default.
    block_bytes = (tb * num_meas * x_p.dtype.itemsize + tb * out_pad * 4
                   + sum(int(p.size) * p.dtype.itemsize for p in prepared))
    act_bytes = 8 * tb * n_pad * 4
    vmem_limit = min(max(4 * block_bytes + act_bytes + (4 << 20), 32 << 20), 64 << 20)

    out_padded = pl.pallas_call(
        _make_kernel(split_halves),
        out_shape=jax.ShapeDtypeStruct((b_pad, out_pad), jnp.float32),
        grid=grid,
        in_specs=in_specs,
        out_specs=out_specs,
        compiler_params=pltpu.CompilerParams(
            dimension_semantics=("parallel",),
            vmem_limit_bytes=int(vmem_limit)),
        cost_estimate=cost,
    )(x_p, *prepared)

    return out_padded[:B, :num_meas]


# ---------------------------------------------------------------------------
# Deterministic parameter construction (xavier_uniform weights, zero biases),
# matching nn.Linear shapes of the PyTorch module.  (The PyTorch
# `xavier_uniform_(w) * 4` does not scale in place, so the effective init is
# plain xavier_uniform.)
# ---------------------------------------------------------------------------
def xavier_uniform(key, fan_in, fan_out):
    bound = jnp.sqrt(6.0 / (fan_in + fan_out))
    # Stored as (in, out): transpose of PyTorch's (out, in) weight.
    return jax.random.uniform(key, (fan_in, fan_out), dtype=jnp.float32,
                              minval=-bound, maxval=bound)


def make_params(key, num_meas, num_obsv, num_neurons):
    dims = [
        (num_meas, num_neurons),     # Encoder_In
        (num_neurons, num_neurons),  # Encoder_Hdd
        (num_neurons, num_neurons),  # Encoder_Hdd2
        (num_neurons, num_obsv),     # Encoder_out
        (num_obsv, num_obsv),        # Koopman (bias=False)
        (num_obsv, num_neurons),     # Decoder_In
        (num_neurons, num_neurons),  # Decoder_Hdd
        (num_neurons, num_neurons),  # Decoder_Hdd2
        (num_neurons, num_meas),     # Decoder_out
    ]
    keys = jax.random.split(key, len(dims))
    params = []
    for i, (fi, fo) in enumerate(dims):
        params.append(xavier_uniform(keys[i], fi, fo))
        if i != 4:  # Koopman has no bias
            params.append(jnp.zeros((1, fo), dtype=jnp.float32))
    return params


def reference_forward(x, params):
    """Pure-JAX reference, same op order as the PyTorch forward (unfolded)."""
    (w_ei, b_ei, w_eh, b_eh, w_eh2, b_eh2, w_eo, b_eo,
     w_k,
     w_di, b_di, w_dh, b_dh, w_dh2, b_dh2, w_do, b_do) = params
    h = jax.nn.relu(x @ w_ei + b_ei)
    h = jax.nn.relu(h @ w_eh + b_eh)
    h = jax.nn.relu(h @ w_eh2 + b_eh2)
    y = h @ w_eo + b_eo
    y = y @ w_k
    h = jax.nn.relu(y @ w_di + b_di)
    h = jax.nn.relu(h @ w_dh + b_dh)
    h = jax.nn.relu(h @ w_dh2 + b_dh2)
    return h @ w_do + b_do


if __name__ == "__main__":
    NUM_MEAS, NUM_OBSV, NUM_NEURONS = 4, 8, 32

    key = jax.random.PRNGKey(0)
    k_p, k1, k2, k3 = jax.random.split(key, 4)
    params = make_params(k_p, NUM_MEAS, NUM_OBSV, NUM_NEURONS)
    # Fold + pad exactly once (hoisted out of the per-call hot path).
    prepared, meta = prepare_params(params)

    # 1) Tiny batch: single grid step, no in-kernel split.
    x1 = jax.random.normal(k1, (8, NUM_MEAS), dtype=jnp.float32)
    o1 = jax.block_until_ready(autoencoder_forward(x1, prepared, meta))
    r1 = reference_forward(x1, params)
    assert o1.shape == (8, NUM_MEAS), o1.shape
    assert jnp.allclose(o1, r1, atol=1e-5, rtol=1e-5), \
        float(jnp.max(jnp.abs(o1 - r1)))

    # 2) Ragged batch: 2 grid steps, padding waste bounded to 8 rows.
    x2 = jax.random.normal(k2, (200, NUM_MEAS), dtype=jnp.float32)
    o2 = jax.block_until_ready(autoencoder_forward(x2, prepared, meta))
    r2 = reference_forward(x2, params)
    assert o2.shape == (200, NUM_MEAS), o2.shape
    assert jnp.allclose(o2, r2, atol=1e-5, rtol=1e-5), \
        float(jnp.max(jnp.abs(o2 - r2)))

    # 3) Even batch, tile multiple of 16: exercises the 2-way interleaved chains.
    x3 = jax.random.normal(k3, (256, NUM_MEAS), dtype=jnp.float32)
    o3 = jax.block_until_ready(autoencoder_forward(x3, prepared, meta, tile_b=128))
    r3 = reference_forward(x3, params)
    assert o3.shape == (256, NUM_MEAS), o3.shape
    assert jnp.allclose(o3, r3, atol=1e-5, rtol=1e-5), \
        float(jnp.max(jnp.abs(o3 - r3)))

    print("KERNEL_OK")
</pallas_src>

<mosaic_0001>
module attributes {stable_mosaic.version = 11 : i64} {
  func.func @kernel(%arg0: i32, %arg1: memref<8x4xf32, #tpu.memory_space<vmem>>, %arg2: memref<4x128xf32, #tpu.memory_space<vmem>>, %arg3: memref<1x128xf32, #tpu.memory_space<vmem>>, %arg4: memref<128x128xf32, #tpu.memory_space<vmem>>, %arg5: memref<1x128xf32, #tpu.memory_space<vmem>>, %arg6: memref<128x128xf32, #tpu.memory_space<vmem>>, %arg7: memref<1x128xf32, #tpu.memory_space<vmem>>, %arg8: memref<128x128xf32, #tpu.memory_space<vmem>>, %arg9: memref<1x128xf32, #tpu.memory_space<vmem>>, %arg10: memref<128x128xf32, #tpu.memory_space<vmem>>, %arg11: memref<1x128xf32, #tpu.memory_space<vmem>>, %arg12: memref<128x128xf32, #tpu.memory_space<vmem>>, %arg13: memref<1x128xf32, #tpu.memory_space<vmem>>, %arg14: memref<128x128xf32, #tpu.memory_space<vmem>>, %arg15: memref<1x128xf32, #tpu.memory_space<vmem>>, %arg16: memref<8x128xf32, #tpu.memory_space<vmem>>) attributes {dimension_semantics = [#tpu.dimension_semantics<parallel>], iteration_bounds = array<i64: 1>, scalar_prefetch = 0 : i64, scratch_operands = 0 : i64, tpu.core_type = #tpu.core_type<tc>, window_params = [{transform_indices = @transform_0, window_bounds = array<i64: 8, 4>}, {pipeline_mode = #tpu.pipeline_mode<synchronous>, transform_indices = @transform_1, window_bounds = array<i64: 4, 128>}, {pipeline_mode = #tpu.pipeline_mode<synchronous>, transform_indices = @transform_2, window_bounds = array<i64: 1, 128>}, {pipeline_mode = #tpu.pipeline_mode<synchronous>, transform_indices = @transform_3, window_bounds = array<i64: 128, 128>}, {pipeline_mode = #tpu.pipeline_mode<synchronous>, transform_indices = @transform_4, window_bounds = array<i64: 1, 128>}, {pipeline_mode = #tpu.pipeline_mode<synchronous>, transform_indices = @transform_5, window_bounds = array<i64: 128, 128>}, {pipeline_mode = #tpu.pipeline_mode<synchronous>, transform_indices = @transform_6, window_bounds = array<i64: 1, 128>}, {pipeline_mode = #tpu.pipeline_mode<synchronous>, transform_indices = @transform_7, window_bounds = array<i64: 128, 128>}, {pipeline_mode = #tpu.pipeline_mode<synchronous>, transform_indices = @transform_8, window_bounds = array<i64: 1, 128>}, {pipeline_mode = #tpu.pipeline_mode<synchronous>, transform_indices = @transform_9, window_bounds = array<i64: 128, 128>}, {pipeline_mode = #tpu.pipeline_mode<synchronous>, transform_indices = @transform_10, window_bounds = array<i64: 1, 128>}, {pipeline_mode = #tpu.pipeline_mode<synchronous>, transform_indices = @transform_11, window_bounds = array<i64: 128, 128>}, {pipeline_mode = #tpu.pipeline_mode<synchronous>, transform_indices = @transform_12, window_bounds = array<i64: 1, 128>}, {pipeline_mode = #tpu.pipeline_mode<synchronous>, transform_indices = @transform_13, window_bounds = array<i64: 128, 128>}, {pipeline_mode = #tpu.pipeline_mode<synchronous>, transform_indices = @transform_14, window_bounds = array<i64: 1, 128>}, {transform_indices = @transform_15, window_bounds = array<i64: 8, 128>}]} {
    %c0 = arith.constant 0 : index
    %c0_0 = arith.constant 0 : index
    %0 = vector.load %arg1[%c0, %c0_0] : memref<8x4xf32, #tpu.memory_space<vmem>>, vector<8x4xf32>
    %c0_1 = arith.constant 0 : index
    %c0_2 = arith.constant 0 : index
    %1 = vector.load %arg2[%c0_1, %c0_2] : memref<4x128xf32, #tpu.memory_space<vmem>>, vector<4x128xf32>
    %cst = arith.constant dense<0.000000e+00> : vector<8x128xf32>
    %2 = tpu.matmul %0, %1, %cst {dimension_numbers = #tpu.dot_dimension_numbers<[1], [0], [0], [1], [0, 0, 1, 1], [], []>} : vector<8x4xf32>, vector<4x128xf32>, vector<8x128xf32> -> vector<8x128xf32>
    %c0_3 = arith.constant 0 : index
    %c0_4 = arith.constant 0 : index
    %3 = vector.load %arg3[%c0_3, %c0_4] : memref<1x128xf32, #tpu.memory_space<vmem>>, vector<1x128xf32>
    %4 = vector.broadcast %3 : vector<1x128xf32> to vector<8x128xf32>
    %5 = arith.addf %2, %4 : vector<8x128xf32>
    %cst_5 = arith.constant 0.000000e+00 : f32
    %6 = vector.broadcast %cst_5 : f32 to vector<8x128xf32>
    %7 = arith.maximumf %5, %6 : vector<8x128xf32>
    %c0_6 = arith.constant 0 : index
    %c0_7 = arith.constant 0 : index
    %8 = vector.load %arg4[%c0_6, %c0_7] : memref<128x128xf32, #tpu.memory_space<vmem>>, vector<128x128xf32>
    %cst_8 = arith.constant dense<0.000000e+00> : vector<8x128xf32>
    %9 = tpu.matmul %7, %8, %cst_8 {dimension_numbers = #tpu.dot_dimension_numbers<[1], [0], [0], [1], [0, 0, 1, 1], [], []>} : vector<8x128xf32>, vector<128x128xf32>, vector<8x128xf32> -> vector<8x128xf32>
    %c0_9 = arith.constant 0 : index
    %c0_10 = arith.constant 0 : index
    %10 = vector.load %arg5[%c0_9, %c0_10] : memref<1x128xf32, #tpu.memory_space<vmem>>, vector<1x128xf32>
    %11 = vector.broadcast %10 : vector<1x128xf32> to vector<8x128xf32>
    %12 = arith.addf %9, %11 : vector<8x128xf32>
    %cst_11 = arith.constant 0.000000e+00 : f32
    %13 = vector.broadcast %cst_11 : f32 to vector<8x128xf32>
    %14 = arith.maximumf %12, %13 : vector<8x128xf32>
    %c0_12 = arith.constant 0 : index
    %c0_13 = arith.constant 0 : index
    %15 = vector.load %arg6[%c0_12, %c0_13] : memref<128x128xf32, #tpu.memory_space<vmem>>, vector<128x128xf32>
    %cst_14 = arith.constant dense<0.000000e+00> : vector<8x128xf32>
    %16 = tpu.matmul %14, %15, %cst_14 {dimension_numbers = #tpu.dot_dimension_numbers<[1], [0], [0], [1], [0, 0, 1, 1], [], []>} : vector<8x128xf32>, vector<128x128xf32>, vector<8x128xf32> -> vector<8x128xf32>
    %c0_15 = arith.constant 0 : index
    %c0_16 = arith.constant 0 : index
    %17 = vector.load %arg7[%c0_15, %c0_16] : memref<1x128xf32, #tpu.memory_space<vmem>>, vector<1x128xf32>
    %18 = vector.broadcast %17 : vector<1x128xf32> to vector<8x128xf32>
    %19 = arith.addf %16, %18 : vector<8x128xf32>
    %cst_17 = arith.constant 0.000000e+00 : f32
    %20 = vector.broadcast %cst_17 : f32 to vector<8x128xf32>
    %21 = arith.maximumf %19, %20 : vector<8x128xf32>
    %c0_18 = arith.constant 0 : index
    %c0_19 = arith.constant 0 : index
    %22 = vector.load %arg8[%c0_18, %c0_19] : memref<128x128xf32, #tpu.memory_space<vmem>>, vector<128x128xf32>
    %cst_20 = arith.constant dense<0.000000e+00> : vector<8x128xf32>
    %23 = tpu.matmul %21, %22, %cst_20 {dimension_numbers = #tpu.dot_dimension_numbers<[1], [0], [0], [1], [0, 0, 1, 1], [], []>} : vector<8x128xf32>, vector<128x128xf32>, vector<8x128xf32> -> vector<8x128xf32>
    %c0_21 = arith.constant 0 : index
    %c0_22 = arith.constant 0 : index
    %24 = vector.load %arg9[%c0_21, %c0_22] : memref<1x128xf32, #tpu.memory_space<vmem>>, vector<1x128xf32>
    %25 = vector.broadcast %24 : vector<1x128xf32> to vector<8x128xf32>
    %26 = arith.addf %23, %25 : vector<8x128xf32>
    %cst_23 = arith.constant 0.000000e+00 : f32
    %27 = vector.broadcast %cst_23 : f32 to vector<8x128xf32>
    %28 = arith.maximumf %26, %27 : vector<8x128xf32>
    %c0_24 = arith.constant 0 : index
    %c0_25 = arith.constant 0 : index
    %29 = vector.load %arg10[%c0_24, %c0_25] : memref<128x128xf32, #tpu.memory_space<vmem>>, vector<128x128xf32>
    %cst_26 = arith.constant dense<0.000000e+00> : vector<8x128xf32>
    %30 = tpu.matmul %28, %29, %cst_26 {dimension_numbers = #tpu.dot_dimension_numbers<[1], [0], [0], [1], [0, 0, 1, 1], [], []>} : vector<8x128xf32>, vector<128x128xf32>, vector<8x128xf32> -> vector<8x128xf32>
    %c0_27 = arith.constant 0 : index
    %c0_28 = arith.constant 0 : index
    %31 = vector.load %arg11[%c0_27, %c0_28] : memref<1x128xf32, #tpu.memory_space<vmem>>, vector<1x128xf32>
    %32 = vector.broadcast %31 : vector<1x128xf32> to vector<8x128xf32>
    %33 = arith.addf %30, %32 : vector<8x128xf32>
    %cst_29 = arith.constant 0.000000e+00 : f32
    %34 = vector.broadcast %cst_29 : f32 to vector<8x128xf32>
    %35 = arith.maximumf %33, %34 : vector<8x128xf32>
    %c0_30 = arith.constant 0 : index
    %c0_31 = arith.constant 0 : index
    %36 = vector.load %arg12[%c0_30, %c0_31] : memref<128x128xf32, #tpu.memory_space<vmem>>, vector<128x128xf32>
    %cst_32 = arith.constant dense<0.000000e+00> : vector<8x128xf32>
    %37 = tpu.matmul %35, %36, %cst_32 {dimension_numbers = #tpu.dot_dimension_numbers<[1], [0], [0], [1], [0, 0, 1, 1], [], []>} : vector<8x128xf32>, vector<128x128xf32>, vector<8x128xf32> -> vector<8x128xf32>
    %c0_33 = arith.constant 0 : index
    %c0_34 = arith.constant 0 : index
    %38 = vector.load %arg13[%c0_33, %c0_34] : memref<1x128xf32, #tpu.memory_space<vmem>>, vector<1x128xf32>
    %39 = vector.broadcast %38 : vector<1x128xf32> to vector<8x128xf32>
    %40 = arith.addf %37, %39 : vector<8x128xf32>
    %cst_35 = arith.constant 0.000000e+00 : f32
    %41 = vector.broadcast %cst_35 : f32 to vector<8x128xf32>
    %42 = arith.maximumf %40, %41 : vector<8x128xf32>
    %c0_36 = arith.constant 0 : index
    %c0_37 = arith.constant 0 : index
    %43 = vector.load %arg14[%c0_36, %c0_37] : memref<128x128xf32, #tpu.memory_space<vmem>>, vector<128x128xf32>
    %cst_38 = arith.constant dense<0.000000e+00> : vector<8x128xf32>
    %44 = tpu.matmul %42, %43, %cst_38 {dimension_numbers = #tpu.dot_dimension_numbers<[1], [0], [0], [1], [0, 0, 1, 1], [], []>} : vector<8x128xf32>, vector<128x128xf32>, vector<8x128xf32> -> vector<8x128xf32>
    %c0_39 = arith.constant 0 : index
    %c0_40 = arith.constant 0 : index
    %45 = vector.load %arg15[%c0_39, %c0_40] : memref<1x128xf32, #tpu.memory_space<vmem>>, vector<1x128xf32>
    %46 = vector.broadcast %45 : vector<1x128xf32> to vector<8x128xf32>
    %47 = arith.addf %44, %46 : vector<8x128xf32>
    %c0_41 = arith.constant 0 : index
    %c0_42 = arith.constant 0 : index
    %48 = vector.load %arg16[%c0_41, %c0_42] : memref<8x128xf32, #tpu.memory_space<vmem>>, vector<8x128xf32>
    tpu.vector_store %arg16[%c0_41, %c0_42], %47 {strides = array<i32>} : memref<8x128xf32, #tpu.memory_space<vmem>>, vector<8x128xf32>,
    return
  }
  func.func @transform_0(%arg0: i32) -> (i32, i32) {
    %c0_i32 = arith.constant 0 : i32
    %c0_i32_0 = arith.constant 0 : i32
    return %arg0, %c0_i32 : i32, i32
  }
  func.func @transform_1(%arg0: i32) -> (i32, i32) {
    %c0_i32 = arith.constant 0 : i32
    %c0_i32_0 = arith.constant 0 : i32
    %c0_i32_1 = arith.constant 0 : i32
    return %c0_i32, %c0_i32_0 : i32, i32
  }
  func.func @transform_2(%arg0: i32) -> (i32, i32) {
    %c0_i32 = arith.constant 0 : i32
    %c0_i32_0 = arith.constant 0 : i32
    %c0_i32_1 = arith.constant 0 : i32
    return %c0_i32, %c0_i32_0 : i32, i32
  }
  func.func @transform_3(%arg0: i32) -> (i32, i32) {
    %c0_i32 = arith.constant 0 : i32
    %c0_i32_0 = arith.constant 0 : i32
    %c0_i32_1 = arith.constant 0 : i32
    return %c0_i32, %c0_i32_0 : i32, i32
  }
  func.func @transform_4(%arg0: i32) -> (i32, i32) {
    %c0_i32 = arith.constant 0 : i32
    %c0_i32_0 = arith.constant 0 : i32
    %c0_i32_1 = arith.constant 0 : i32
    return %c0_i32, %c0_i32_0 : i32, i32
  }
  func.func @transform_5(%arg0: i32) -> (i32, i32) {
    %c0_i32 = arith.constant 0 : i32
    %c0_i32_0 = arith.constant 0 : i32
    %c0_i32_1 = arith.constant 0 : i32
    return %c0_i32, %c0_i32_0 : i32, i32
  }
  func.func @transform_6(%arg0: i32) -> (i32, i32) {
    %c0_i32 = arith.constant 0 : i32
    %c0_i32_0 = arith.constant 0 : i32
    %c0_i32_1 = arith.constant 0 : i32
    return %c0_i32, %c0_i32_0 : i32, i32
  }
  func.func @transform_7(%arg0: i32) -> (i32, i32) {
    %c0_i32 = arith.constant 0 : i32
    %c0_i32_0 = arith.constant 0 : i32
    %c0_i32_1 = arith.constant 0 : i32
    return %c0_i32, %c0_i32_0 : i32, i32
  }
  func.func @transform_8(%arg0: i32) -> (i32, i32) {
    %c0_i32 = arith.constant 0 : i32
    %c0_i32_0 = arith.constant 0 : i32
    %c0_i32_1 = arith.constant 0 : i32
    return %c0_i32, %c0_i32_0 : i32, i32
  }
  func.func @transform_9(%arg0: i32) -> (i32, i32) {
    %c0_i32 = arith.constant 0 : i32
    %c0_i32_0 = arith.constant 0 : i32
    %c0_i32_1 = arith.constant 0 : i32
    return %c0_i32, %c0_i32_0 : i32, i32
  }
  func.func @transform_10(%arg0: i32) -> (i32, i32) {
    %c0_i32 = arith.constant 0 : i32
    %c0_i32_0 = arith.constant 0 : i32
    %c0_i32_1 = arith.constant 0 : i32
    return %c0_i32, %c0_i32_0 : i32, i32
  }
  func.func @transform_11(%arg0: i32) -> (i32, i32) {
    %c0_i32 = arith.constant 0 : i32
    %c0_i32_0 = arith.constant 0 : i32
    %c0_i32_1 = arith.constant 0 : i32
    return %c0_i32, %c0_i32_0 : i32, i32
  }
  func.func @transform_12(%arg0: i32) -> (i32, i32) {
    %c0_i32 = arith.constant 0 : i32
    %c0_i32_0 = arith.constant 0 : i32
    %c0_i32_1 = arith.constant 0 : i32
    return %c0_i32, %c0_i32_0 : i32, i32
  }
  func.func @transform_13(%arg0: i32) -> (i32, i32) {
    %c0_i32 = arith.constant 0 : i32
    %c0_i32_0 = arith.constant 0 : i32
    %c0_i32_1 = arith.constant 0 : i32
    return %c0_i32, %c0_i32_0 : i32, i32
  }
  func.func @transform_14(%arg0: i32) -> (i32, i32) {
    %c0_i32 = arith.constant 0 : i32
    %c0_i32_0 = arith.constant 0 : i32
    %c0_i32_1 = arith.constant 0 : i32
    return %c0_i32, %c0_i32_0 : i32, i32
  }
  func.func @transform_15(%arg0: i32) -> (i32, i32) {
    %c0_i32 = arith.constant 0 : i32
    %c0_i32_0 = arith.constant 0 : i32
    return %arg0, %c0_i32 : i32, i32
  }
}

</mosaic_0001>

<llo_original>
// kernel: tpu_custom_call.1
$region0: #{tpu_custom_call.1}
  #allocation0 [shape = 'u32[]', space=smem, size = 0x4, offset = 0x4, fixed_abs, tag = 'smem constant byte address 0x4 - core index']
  #allocation1 [shape = 'u32[144,128]{1,0:T(1,128)}', space=vmem, size = 0x12000, scoped, tag = 'internal scratch']
  %s0 = inlined_call_operand.vmem [shape: f32[8,4], index: 0, kind: input, shape index: {}]
  %s1 = inlined_call_operand.vmem [shape: f32[4,128], index: 1, kind: input, shape index: {}]
  %s2 = inlined_call_operand.vmem [shape: f32[1,128], index: 2, kind: input, shape index: {}]
  %s3 = inlined_call_operand.hbm [shape: f32[128,128], index: 3, kind: input, shape index: {}]
  %s4 = inlined_call_operand.vmem [shape: f32[1,128], index: 4, kind: input, shape index: {}]
  %s5 = inlined_call_operand.hbm [shape: f32[128,128], index: 5, kind: input, shape index: {}]
  %s6 = inlined_call_operand.vmem [shape: f32[1,128], index: 6, kind: input, shape index: {}]
  %s7 = inlined_call_operand.hbm [shape: f32[128,128], index: 7, kind: input, shape index: {}]
  %s8 = inlined_call_operand.vmem [shape: f32[1,128], index: 8, kind: input, shape index: {}]
  %s9 = inlined_call_operand.hbm [shape: f32[128,128], index: 9, kind: input, shape index: {}]
  %s10 = inlined_call_operand.vmem [shape: f32[1,128], index: 10, kind: input, shape index: {}]
  %s11 = inlined_call_operand.hbm [shape: f32[128,128], index: 11, kind: input, shape index: {}]
  %s12 = inlined_call_operand.vmem [shape: f32[1,128], index: 12, kind: input, shape index: {}]
  %s13 = inlined_call_operand.hbm [shape: f32[128,128], index: 13, kind: input, shape index: {}]
  %s14 = inlined_call_operand.vmem [shape: f32[1,128], index: 14, kind: input, shape index: {}]
  %s15 = inlined_call_operand.hbm [shape: f32[8,128], index: 15, kind: output, shape index: {}]
  %s16 = sld [smem:[#allocation0]]
  $region94: #{tpu_custom_call.1} parent=0
    _
  %s18 = ssub.s32 1, %s16
  %s19 = scalar_select 0, %s18, %s16
  $region1: #{tpu_custom_call.1} parent=0
    #allocation2 [shape = 'u8[65536]{0}', space=vmem, size = 0x10000, scoped, tag = 'input window, operand 3, single buffered']
    #allocation3 [shape = 's32[1]{0}', space=sflag, size = 0x4, scoped, tag = 'scoped memory for tpu_custom_call.1']
    #allocation4 [shape = 's32[1]{0}', space=sflag, size = 0x4, scoped, tag = 'scoped memory for tpu_custom_call.1']
    #allocation5 [shape = 'u8[65536]{0}', space=vmem, size = 0x10000, scoped, tag = 'input window, operand 5, single buffered']
    #allocation6 [shape = 's32[1]{0}', space=sflag, size = 0x4, scoped, tag = 'scoped memory for tpu_custom_call.1']
    #allocation7 [shape = 'u8[65536]{0}', space=vmem, size = 0x10000, scoped, tag = 'input window, operand 7, single buffered']
    #allocation8 [shape = 'u8[65536]{0}', space=vmem, size = 0x10000, scoped, tag = 'input window, operand 9, single buffered']
    #allocation9 [shape = 's32[1]{0}', space=sflag, size = 0x4, scoped, tag = 'scoped memory for tpu_custom_call.1']
    #allocation10 [shape = 'u8[65536]{0}', space=vmem, size = 0x10000, scoped, tag = 'input window, operand 11, single buffered']
    #allocation11 [shape = 'u8[65536]{0}', space=vmem, size = 0x10000, scoped, tag = 'input window, operand 13, single buffered']
    #allocation12 [shape = 's32[1]{0}', space=sflag, size = 0x4, scoped, tag = 'scoped memory for tpu_custom_call.1']
    #allocation13 [shape = 'u8[4096]{0}', space=vmem, size = 0x1000, scoped, tag = 'output window, operand 0, single buffered']
    %20 = vsyncpa [#allocation3], 0
    %21 = vsyncpa [#allocation6], 0
    %22 = vsyncpa [#allocation9], 0
    %23 = vsyncpa [#allocation12], 0
    %24 = vsyncpa [#allocation4], 0
    // Predicated region
    $region2: #{tpu_custom_call.1} parent=1 // pred_check
      _
    $region3: #{tpu_custom_call.1} parent=1 // pred_check_branch
      %26 = sbr.rel (0) target = $region5
    $region4: #{tpu_custom_call.1} parent=1 // pred_region
      _
    $region5: #{tpu_custom_call.1} parent=1 // pred_fallthru
      _
    // Predicated region
    $region6: #{tpu_custom_call.1} parent=1 // pred_check
      _
    $region7: #{tpu_custom_call.1} parent=1 // pred_check_branch
      %28 = sbr.rel (0) target = $region9
    $region8: #{tpu_custom_call.1} parent=1 // pred_region
      _
    $region9: #{tpu_custom_call.1} parent=1 // pred_fallthru
      _
    // Predicated region
    $region10: #{tpu_custom_call.1} parent=1 // pred_check
      _
    $region11: #{tpu_custom_call.1} parent=1 // pred_check_branch
      %30 = sbr.rel (0) target = $region13
    $region12: #{tpu_custom_call.1} parent=1 // pred_region
      _
    $region13: #{tpu_custom_call.1} parent=1 // pred_fallthru
      _
    // Predicated region
    $region14: #{tpu_custom_call.1} parent=1 // pred_check
      _
    $region15: #{tpu_custom_call.1} parent=1 // pred_check_branch
      %32 = sbr.rel (0) target = $region17
    $region16: #{tpu_custom_call.1} parent=1 // pred_region
      %s34 = ssub.s32 2048, 2048
      %35 = vsyncadd [#allocation3], %s34
      %s36 = sshll.u32 [#allocation2], 4
      %s37 = int_to_ptr.vmem [resolvable:$true] %s36
      %42 = dma.hbm_to_vmem [thread:$0]  %s3, 2048, %s37, [#allocation3], 128, 128, 8
    $region17: #{tpu_custom_call.1} parent=1 // pred_fallthru
      _
    // Predicated region
    $region18: #{tpu_custom_call.1} parent=1 // pred_check
      _
    $region19: #{tpu_custom_call.1} parent=1 // pred_check_branch
      %44 = sbr.rel (0) target = $region21
    $region20: #{tpu_custom_call.1} parent=1 // pred_region
      _
    $region21: #{tpu_custom_call.1} parent=1 // pred_fallthru
      _
    // Predicated region
    $region22: #{tpu_custom_call.1} parent=1 // pred_check
      _
    $region23: #{tpu_custom_call.1} parent=1 // pred_check_branch
      %46 = sbr.rel (0) target = $region25
    $region24: #{tpu_custom_call.1} parent=1 // pred_region
      %s48 = ssub.s32 2048, 2048
      %49 = vsyncadd [#allocation6], %s48
      %s50 = sshll.u32 [#allocation5], 4
      %s51 = int_to_ptr.vmem [resolvable:$true] %s50
      %56 = dma.hbm_to_vmem [thread:$0]  %s5, 2048, %s51, [#allocation6], 128, 128, 8
    $region25: #{tpu_custom_call.1} parent=1 // pred_fallthru
      _
    // Predicated region
    $region26: #{tpu_custom_call.1} parent=1 // pred_check
      _
    $region27: #{tpu_custom_call.1} parent=1 // pred_check_branch
      %58 = sbr.rel (0) target = $region29
    $region28: #{tpu_custom_call.1} parent=1 // pred_region
      _
    $region29: #{tpu_custom_call.1} parent=1 // pred_fallthru
      _
    // Predicated region
    $region30: #{tpu_custom_call.1} parent=1 // pred_check
      _
    $region31: #{tpu_custom_call.1} parent=1 // pred_check_branch
      %60 = sbr.rel (0) target = $region33
    $region32: #{tpu_custom_call.1} parent=1 // pred_region
      %s62 = ssub.s32 2048, 2048
      %63 = vsyncadd [#allocation6], %s62
      %s64 = sshll.u32 [#allocation7], 4
      %s65 = int_to_ptr.vmem [resolvable:$true] %s64
      %70 = dma.hbm_to_vmem [thread:$0]  %s7, 2048, %s65, [#allocation6], 128, 128, 8
    $region33: #{tpu_custom_call.1} parent=1 // pred_fallthru
      _
    // Predicated region
    $region34: #{tpu_custom_call.1} parent=1 // pred_check
      _
    $region35: #{tpu_custom_call.1} parent=1 // pred_check_branch
      %72 = sbr.rel (0) target = $region37
    $region36: #{tpu_custom_call.1} parent=1 // pred_region
      _
    $region37: #{tpu_custom_call.1} parent=1 // pred_fallthru
      _
    // Predicated region
    $region38: #{tpu_custom_call.1} parent=1 // pred_check
      _
    $region39: #{tpu_custom_call.1} parent=1 // pred_check_branch
      %74 = sbr.rel (0) target = $region41
    $region40: #{tpu_custom_call.1} parent=1 // pred_region
      %s76 = ssub.s32 2048, 2048
      %77 = vsyncadd [#allocation9], %s76
      %s78 = sshll.u32 [#allocation8], 4
      %s79 = int_to_ptr.vmem [resolvable:$true] %s78
      %84 = dma.hbm_to_vmem [thread:$0]  %s9, 2048, %s79, [#allocation9], 128, 128, 8
    $region41: #{tpu_custom_call.1} parent=1 // pred_fallthru
      _
    // Predicated region
    $region42: #{tpu_custom_call.1} parent=1 // pred_check
      _
    $region43: #{tpu_custom_call.1} parent=1 // pred_check_branch
      %86 = sbr.rel (0) target = $region45
    $region44: #{tpu_custom_call.1} parent=1 // pred_region
      _
    $region45: #{tpu_custom_call.1} parent=1 // pred_fallthru
      _
    // Predicated region
    $region46: #{tpu_custom_call.1} parent=1 // pred_check
      _
    $region47: #{tpu_custom_call.1} parent=1 // pred_check_branch
      %88 = sbr.rel (0) target = $region49
    $region48: #{tpu_custom_call.1} parent=1 // pred_region
      %s90 = ssub.s32 2048, 2048
      %91 = vsyncadd [#allocation9], %s90
      %s92 = sshll.u32 [#allocation10], 4
      %s93 = int_to_ptr.vmem [resolvable:$true] %s92
      %98 = dma.hbm_to_vmem [thread:$0]  %s11, 2048, %s93, [#allocation9], 128, 128, 8
    $region49: #{tpu_custom_call.1} parent=1 // pred_fallthru
      _
    // Predicated region
    $region50: #{tpu_custom_call.1} parent=1 // pred_check
      _
    $region51: #{tpu_custom_call.1} parent=1 // pred_check_branch
      %100 = sbr.rel (0) target = $region53
    $region52: #{tpu_custom_call.1} parent=1 // pred_region
      _
    $region53: #{tpu_custom_call.1} parent=1 // pred_fallthru
      _
    // Predicated region
    $region54: #{tpu_custom_call.1} parent=1 // pred_check
      _
    $region55: #{tpu_custom_call.1} parent=1 // pred_check_branch
      %102 = sbr.rel (0) target = $region57
    $region56: #{tpu_custom_call.1} parent=1 // pred_region
      %s104 = ssub.s32 2048, 2048
      %105 = vsyncadd [#allocation12], %s104
      %s106 = sshll.u32 [#allocation11], 4
      %s107 = int_to_ptr.vmem [resolvable:$true] %s106
      %112 = dma.hbm_to_vmem [thread:$0]  %s13, 2048, %s107, [#allocation12], 128, 128, 8
    $region57: #{tpu_custom_call.1} parent=1 // pred_fallthru
      _
    // Predicated region
    $region58: #{tpu_custom_call.1} parent=1 // pred_check
      _
    $region59: #{tpu_custom_call.1} parent=1 // pred_check_branch
      %114 = sbr.rel (0) target = $region61
    $region60: #{tpu_custom_call.1} parent=1 // pred_region
      _
    $region61: #{tpu_custom_call.1} parent=1 // pred_fallthru
      _
    // Predicated region
    $region62: #{tpu_custom_call.1} parent=1 // pred_check
      _
    $region63: #{tpu_custom_call.1} parent=1 // pred_check_branch
      %116 = sbr.rel (0) target = $region65
    $region64: #{tpu_custom_call.1} parent=1 // pred_region
      %117 = dma.done [#allocation3], 2048
    $region65: #{tpu_custom_call.1} parent=1 // pred_fallthru
      _
    // Predicated region
    $region66: #{tpu_custom_call.1} parent=1 // pred_check
      _
    $region67: #{tpu_custom_call.1} parent=1 // pred_check_branch
      %119 = sbr.rel (0) target = $region69
    $region68: #{tpu_custom_call.1} parent=1 // pred_region
      %120 = dma.done [#allocation6], 2048
    $region69: #{tpu_custom_call.1} parent=1 // pred_fallthru
      _
    // Predicated region
    $region70: #{tpu_custom_call.1} parent=1 // pred_check
      _
    $region71: #{tpu_custom_call.1} parent=1 // pred_check_branch
      %122 = sbr.rel (0) target = $region73
    $region72: #{tpu_custom_call.1} parent=1 // pred_region
      %123 = dma.done [#allocation6], 2048
    $region73: #{tpu_custom_call.1} parent=1 // pred_fallthru
      _
    // Predicated region
    $region74: #{tpu_custom_call.1} parent=1 // pred_check
      _
    $region75: #{tpu_custom_call.1} parent=1 // pred_check_branch
      %125 = sbr.rel (0) target = $region77
    $region76: #{tpu_custom_call.1} parent=1 // pred_region
      %126 = dma.done [#allocation9], 2048
    $region77: #{tpu_custom_call.1} parent=1 // pred_fallthru
      _
    // Predicated region
    $region78: #{tpu_custom_call.1} parent=1 // pred_check
      _
    $region79: #{tpu_custom_call.1} parent=1 // pred_check_branch
      %128 = sbr.rel (0) target = $region81
    $region80: #{tpu_custom_call.1} parent=1 // pred_region
      %129 = dma.done [#allocation9], 2048
    $region81: #{tpu_custom_call.1} parent=1 // pred_fallthru
      _
    // Predicated region
    $region82: #{tpu_custom_call.1} parent=1 // pred_check
      _
    $region83: #{tpu_custom_call.1} parent=1 // pred_check_branch
      %131 = sbr.rel (0) target = $region85
    $region84: #{tpu_custom_call.1} parent=1 // pred_region
      %132 = dma.done [#allocation12], 2048
    $region85: #{tpu_custom_call.1} parent=1 // pred_fallthru
      _
    %v133 = vld [vmem:[%s0] sm:$0xff]
    %v134 = vld [vmem:[%s1] sm:$0xf]
    %v135 = vld [vmem:[%s2] sm:$0x1]
    %v137 = vlaneseq
    %v138 = vshrl.u32 %v137, 7
    %v139 = vsub.s32 0, %v138
    %v140 = vrot.slane %v135, %v139
    %vm142 = vcmask 31744
    %v144 = vsel %vm142, %v133, 0
    %vm146 = vcmask 1043456
    %v148 = vsel %vm146, %v134, 0
    %150 = vmatprep.subr.mxu0 0.0
    %151 = vmatpush1.msra.mxu0 0.0
    %152 = vmatprep.subr.mxu0 0.0
    %153 = vmatpush1.msra.mxu0 0.0
    %154 = vmatprep.subr.mxu0 0.0
    %155 = vmatpush1.msra.mxu0 0.0
    %156 = vmatprep.subr.mxu0 0.0
    %157 = vmatpush1.msra.mxu0 0.0
    %158 = vmatprep.subr.mxu0 0.0
    %159 = vmatpush1.msra.mxu0 0.0
    %160 = vmatprep.subr.mxu0 0.0
    %161 = vmatpush1.msra.mxu0 0.0
    %162 = vmatprep.subr.mxu0 0.0
    %163 = vmatpush1.msra.mxu0 0.0
    %164 = vmatprep.subr.mxu0 0.0
    %165 = vmatpush1.msra.mxu0 0.0
    %166 = vmatprep.subr.mxu0 0.0
    %167 = vmatpush1.msra.mxu0 0.0
    %168 = vmatprep.subr.mxu0 0.0
    %169 = vmatpush1.msra.mxu0 0.0
    %170 = vmatprep.subr.mxu0 0.0
    %171 = vmatpush1.msra.mxu0 0.0
    %172 = vmatprep.subr.mxu0 0.0
    %173 = vmatpush1.msra.mxu0 0.0
    %174 = vmatprep.subr.mxu0 0.0
    %175 = vmatpush1.msra.mxu0 0.0
    %176 = vmatprep.subr.mxu0 0.0
    %177 = vmatpush1.msra.mxu0 0.0
    %178 = vmatprep.subr.mxu0 0.0
    %179 = vmatpush1.msra.mxu0 0.0
    %180 = vmatprep.subr.mxu0 0.0
    %181 = vmatpush1.msra.mxu0 %v148
    %182 = vmatprep.subr.mxu0 0.0
    %183 = vmatpush2.msra.mxu0 0.0
    %184 = vmatprep.subr.mxu0 0.0
    %185 = vmatpush2.msra.mxu0 0.0
    %186 = vmatprep.subr.mxu0 0.0
    %187 = vmatpush2.msra.mxu0 0.0
    %188 = vmatprep.subr.mxu0 0.0
    %189 = vmatpush2.msra.mxu0 0.0
    %190 = vmatprep.subr.mxu0 0.0
    %191 = vmatpush2.msra.mxu0 0.0
    %192 = vmatprep.subr.mxu0 0.0
    %193 = vmatpush2.msra.mxu0 0.0
    %194 = vmatprep.subr.mxu0 0.0
    %195 = vmatpush2.msra.mxu0 0.0
    %196 = vmatprep.subr.mxu0 0.0
    %197 = vmatpush2.msra.mxu0 0.0
    %198 = vmatprep.subr.mxu0 0.0
    %199 = vmatpush2.msra.mxu0 0.0
    %200 = vmatprep.subr.mxu0 0.0
    %201 = vmatpush2.msra.mxu0 0.0
    %202 = vmatprep.subr.mxu0 0.0
    %203 = vmatpush2.msra.mxu0 0.0
    %204 = vmatprep.subr.mxu0 0.0
    %205 = vmatpush2.msra.mxu0 0.0
    %206 = vmatprep.subr.mxu0 0.0
    %207 = vmatpush2.msra.mxu0 0.0
    %208 = vmatprep.subr.mxu0 0.0
    %209 = vmatpush2.msra.mxu0 0.0
    %210 = vmatprep.subr.mxu0 0.0
    %211 = vmatpush2.msra.mxu0 0.0
    %212 = vmatprep.subr.mxu0 0.0
    %213 = vmatpush2.msra.mxu0 0.0
    %214 = vmatprep.mubr.f32.mxu0 0.0
    %215 = vmatmul.mubr.f32.gmra.mxu0 %v144
    %v216 = vpop.f32.mrf.mxu0
    %v217 = vadd.f32 %v140, %v216
    %v218 = vpop.f32.mrf.mxu0
    %219 = vdwg.mxu0
    %v220 = vmax.f32 %v217, 0.0
    %v221 = vld [vmem:[#allocation2] sm:$0xff]
    %v222 = vld [vmem:[#allocation2 + $0x8] sm:$0xff]
    %v223 = vld [vmem:[#allocation2 + $0x10] sm:$0xff]
    %v224 = vld [vmem:[#allocation2 + $0x18] sm:$0xff]
    %v225 = vld [vmem:[#allocation2 + $0x20] sm:$0xff]
    %v226 = vld [vmem:[#allocation2 + $0x28] sm:$0xff]
    %v227 = vld [vmem:[#allocation2 + $0x30] sm:$0xff]
    %v228 = vld [vmem:[#allocation2 + $0x38] sm:$0xff]
    %v229 = vld [vmem:[#allocation2 + $0x40] sm:$0xff]
    %v230 = vld [vmem:[#allocation2 + $0x48] sm:$0xff]
    %v231 = vld [vmem:[#allocation2 + $0x50] sm:$0xff]
    %v232 = vld [vmem:[#allocation2 + $0x58] sm:$0xff]
    %v233 = vld [vmem:[#allocation2 + $0x60] sm:$0xff]
    %v234 = vld [vmem:[#allocation2 + $0x68] sm:$0xff]
    %v235 = vld [vmem:[#allocation2 + $0x70] sm:$0xff]
    %v236 = vld [vmem:[#allocation2 + $0x78] sm:$0xff]
    %v237 = vld [vmem:[%s4] sm:$0x1]
    %v239 = vlaneseq
    %v240 = vshrl.u32 %v239, 7
    %v241 = vsub.s32 0, %v240
    %v242 = vrot.slane %v237, %v241
    %244 = vmatprep.subr.mxu0 0.0
    %245 = vmatpush1.msra.mxu0 %v236
    %246 = vmatprep.subr.mxu0 0.0
    %247 = vmatpush1.msra.mxu0 %v235
    %248 = vmatprep.subr.mxu0 0.0
    %249 = vmatpush1.msra.mxu0 %v234
    %250 = vmatprep.subr.mxu0 0.0
    %251 = vmatpush1.msra.mxu0 %v233
    %252 = vmatprep.subr.mxu0 0.0
    %253 = vmatpush1.msra.mxu0 %v232
    %254 = vmatprep.subr.mxu0 0.0
    %255 = vmatpush1.msra.mxu0 %v231
    %256 = vmatprep.subr.mxu0 0.0
    %257 = vmatpush1.msra.mxu0 %v230
    %258 = vmatprep.subr.mxu0 0.0
    %259 = vmatpush1.msra.mxu0 %v229
    %260 = vmatprep.subr.mxu0 0.0
    %261 = vmatpush1.msra.mxu0 %v228
    %262 = vmatprep.subr.mxu0 0.0
    %263 = vmatpush1.msra.mxu0 %v227
    %264 = vmatprep.subr.mxu0 0.0
    %265 = vmatpush1.msra.mxu0 %v226
    %266 = vmatprep.subr.mxu0 0.0
    %267 = vmatpush1.msra.mxu0 %v225
    %268 = vmatprep.subr.mxu0 0.0
    %269 = vmatpush1.msra.mxu0 %v224
    %270 = vmatprep.subr.mxu0 0.0
    %271 = vmatpush1.msra.mxu0 %v223
    %272 = vmatprep.subr.mxu0 0.0
    %273 = vmatpush1.msra.mxu0 %v222
    %274 = vmatprep.subr.mxu0 0.0
    %275 = vmatpush1.msra.mxu0 %v221
    %276 = vmatprep.subr.mxu0 0.0
    %277 = vmatpush2.msra.mxu0 0.0
    %278 = vmatprep.subr.mxu0 0.0
    %279 = vmatpush2.msra.mxu0 0.0
    %280 = vmatprep.subr.mxu0 0.0
    %281 = vmatpush2.msra.mxu0 0.0
    %282 = vmatprep.subr.mxu0 0.0
    %283 = vmatpush2.msra.mxu0 0.0
    %284 = vmatprep.subr.mxu0 0.0
    %285 = vmatpush2.msra.mxu0 0.0
    %286 = vmatprep.subr.mxu0 0.0
    %287 = vmatpush2.msra.mxu0 0.0
    %288 = vmatprep.subr.mxu0 0.0
    %289 = vmatpush2.msra.mxu0 0.0
    %290 = vmatprep.subr.mxu0 0.0
    %291 = vmatpush2.msra.mxu0 0.0
    %292 = vmatprep.subr.mxu0 0.0
    %293 = vmatpush2.msra.mxu0 0.0
    %294 = vmatprep.subr.mxu0 0.0
    %295 = vmatpush2.msra.mxu0 0.0
    %296 = vmatprep.subr.mxu0 0.0
    %297 = vmatpush2.msra.mxu0 0.0
    %298 = vmatprep.subr.mxu0 0.0
    %299 = vmatpush2.msra.mxu0 0.0
    %300 = vmatprep.subr.mxu0 0.0
    %301 = vmatpush2.msra.mxu0 0.0
    %302 = vmatprep.subr.mxu0 0.0
    %303 = vmatpush2.msra.mxu0 0.0
    %304 = vmatprep.subr.mxu0 0.0
    %305 = vmatpush2.msra.mxu0 0.0
    %306 = vmatprep.subr.mxu0 0.0
    %307 = vmatpush2.msra.mxu0 0.0
    %308 = vmatprep.mubr.f32.mxu0 0.0
    %309 = vmatmul.mubr.f32.gmra.mxu0 %v220
    %v310 = vpop.f32.mrf.mxu0
    %v311 = vadd.f32 %v242, %v310
    %v312 = vpop.f32.mrf.mxu0
    %313 = vdwg.mxu0
    %v314 = vmax.f32 %v311, 0.0
    %v315 = vld [vmem:[#allocation5] sm:$0xff]
    %v316 = vld [vmem:[#allocation5 + $0x8] sm:$0xff]
    %v317 = vld [vmem:[#allocation5 + $0x10] sm:$0xff]
    %v318 = vld [vmem:[#allocation5 + $0x18] sm:$0xff]
    %v319 = vld [vmem:[#allocation5 + $0x20] sm:$0xff]
    %v320 = vld [vmem:[#allocation5 + $0x28] sm:$0xff]
    %v321 = vld [vmem:[#allocation5 + $0x30] sm:$0xff]
    %v322 = vld [vmem:[#allocation5 + $0x38] sm:$0xff]
    %v323 = vld [vmem:[#allocation5 + $0x40] sm:$0xff]
    %v324 = vld [vmem:[#allocation5 + $0x48] sm:$0xff]
    %v325 = vld [vmem:[#allocation5 + $0x50] sm:$0xff]
    %v326 = vld [vmem:[#allocation5 + $0x58] sm:$0xff]
    %v327 = vld [vmem:[#allocation5 + $0x60] sm:$0xff]
    %v328 = vld [vmem:[#allocation5 + $0x68] sm:$0xff]
    %v329 = vld [vmem:[#allocation5 + $0x70] sm:$0xff]
    %v330 = vld [vmem:[#allocation5 + $0x78] sm:$0xff]
    %v331 = vld [vmem:[%s6] sm:$0x1]
    %v333 = vlaneseq
    %v334 = vshrl.u32 %v333, 7
    %v335 = vsub.s32 0, %v334
    %v336 = vrot.slane %v331, %v335
    %338 = vmatprep.subr.mxu0 0.0
    %339 = vmatpush1.msra.mxu0 %v330
    %340 = vmatprep.subr.mxu0 0.0
    %341 = vmatpush1.msra.mxu0 %v329
    %342 = vmatprep.subr.mxu0 0.0
    %343 = vmatpush1.msra.mxu0 %v328
    %344 = vmatprep.subr.mxu0 0.0
    %345 = vmatpush1.msra.mxu0 %v327
    %346 = vmatprep.subr.mxu0 0.0
    %347 = vmatpush1.msra.mxu0 %v326
    %348 = vmatprep.subr.mxu0 0.0
    %349 = vmatpush1.msra.mxu0 %v325
    %350 = vmatprep.subr.mxu0 0.0
    %351 = vmatpush1.msra.mxu0 %v324
    %352 = vmatprep.subr.mxu0 0.0
    %353 = vmatpush1.msra.mxu0 %v323
    %354 = vmatprep.subr.mxu0 0.0
    %355 = vmatpush1.msra.mxu0 %v322
    %356 = vmatprep.subr.mxu0 0.0
    %357 = vmatpush1.msra.mxu0 %v321
    %358 = vmatprep.subr.mxu0 0.0
    %359 = vmatpush1.msra.mxu0 %v320
    %360 = vmatprep.subr.mxu0 0.0
    %361 = vmatpush1.msra.mxu0 %v319
    %362 = vmatprep.subr.mxu0 0.0
    %363 = vmatpush1.msra.mxu0 %v318
    %364 = vmatprep.subr.mxu0 0.0
    %365 = vmatpush1.msra.mxu0 %v317
    %366 = vmatprep.subr.mxu0 0.0
    %367 = vmatpush1.msra.mxu0 %v316
    %368 = vmatprep.subr.mxu0 0.0
    %369 = vmatpush1.msra.mxu0 %v315
    %370 = vmatprep.subr.mxu0 0.0
    %371 = vmatpush2.msra.mxu0 0.0
    %372 = vmatprep.subr.mxu0 0.0
    %373 = vmatpush2.msra.mxu0 0.0
    %374 = vmatprep.subr.mxu0 0.0
    %375 = vmatpush2.msra.mxu0 0.0
    %376 = vmatprep.subr.mxu0 0.0
    %377 = vmatpush2.msra.mxu0 0.0
    %378 = vmatprep.subr.mxu0 0.0
    %379 = vmatpush2.msra.mxu0 0.0
    %380 = vmatprep.subr.mxu0 0.0
    %381 = vmatpush2.msra.mxu0 0.0
    %382 = vmatprep.subr.mxu0 0.0
    %383 = vmatpush2.msra.mxu0 0.0
    %384 = vmatprep.subr.mxu0 0.0
    %385 = vmatpush2.msra.mxu0 0.0
    %386 = vmatprep.subr.mxu0 0.0
    %387 = vmatpush2.msra.mxu0 0.0
    %388 = vmatprep.subr.mxu0 0.0
    %389 = vmatpush2.msra.mxu0 0.0
    %390 = vmatprep.subr.mxu0 0.0
    %391 = vmatpush2.msra.mxu0 0.0
    %392 = vmatprep.subr.mxu0 0.0
    %393 = vmatpush2.msra.mxu0 0.0
    %394 = vmatprep.subr.mxu0 0.0
    %395 = vmatpush2.msra.mxu0 0.0
    %396 = vmatprep.subr.mxu0 0.0
    %397 = vmatpush2.msra.mxu0 0.0
    %398 = vmatprep.subr.mxu0 0.0
    %399 = vmatpush2.msra.mxu0 0.0
    %400 = vmatprep.subr.mxu0 0.0
    %401 = vmatpush2.msra.mxu0 0.0
    %402 = vmatprep.mubr.f32.mxu0 0.0
    %403 = vmatmul.mubr.f32.gmra.mxu0 %v314
    %v404 = vpop.f32.mrf.mxu0
    %v405 = vadd.f32 %v336, %v404
    %v406 = vpop.f32.mrf.mxu0
    %407 = vdwg.mxu0
    %v408 = vmax.f32 %v405, 0.0
    %v409 = vld [vmem:[#allocation7] sm:$0xff]
    %v410 = vld [vmem:[#allocation7 + $0x8] sm:$0xff]
    %v411 = vld [vmem:[#allocation7 + $0x10] sm:$0xff]
    %v412 = vld [vmem:[#allocation7 + $0x18] sm:$0xff]
    %v413 = vld [vmem:[#allocation7 + $0x20] sm:$0xff]
    %v414 = vld [vmem:[#allocation7 + $0x28] sm:$0xff]
    %v415 = vld [vmem:[#allocation7 + $0x30] sm:$0xff]
    %v416 = vld [vmem:[#allocation7 + $0x38] sm:$0xff]
    %v417 = vld [vmem:[#allocation7 + $0x40] sm:$0xff]
    %v418 = vld [vmem:[#allocation7 + $0x48] sm:$0xff]
    %v419 = vld [vmem:[#allocation7 + $0x50] sm:$0xff]
    %v420 = vld [vmem:[#allocation7 + $0x58] sm:$0xff]
    %v421 = vld [vmem:[#allocation7 + $0x60] sm:$0xff]
    %v422 = vld [vmem:[#allocation7 + $0x68] sm:$0xff]
    %v423 = vld [vmem:[#allocation7 + $0x70] sm:$0xff]
    %v424 = vld [vmem:[#allocation7 + $0x78] sm:$0xff]
    %v425 = vld [vmem:[%s8] sm:$0x1]
    %v427 = vlaneseq
    %v428 = vshrl.u32 %v427, 7
    %v429 = vsub.s32 0, %v428
    %v430 = vrot.slane %v425, %v429
    %432 = vmatprep.subr.mxu0 0.0
    %433 = vmatpush1.msra.mxu0 %v424
    %434 = vmatprep.subr.mxu0 0.0
    %435 = vmatpush1.msra.mxu0 %v423
    %436 = vmatprep.subr.mxu0 0.0
    %437 = vmatpush1.msra.mxu0 %v422
    %438 = vmatprep.subr.mxu0 0.0
    %439 = vmatpush1.msra.mxu0 %v421
    %440 = vmatprep.subr.mxu0 0.0
    %441 = vmatpush1.msra.mxu0 %v420
    %442 = vmatprep.subr.mxu0 0.0
    %443 = vmatpush1.msra.mxu0 %v419
    %444 = vmatprep.subr.mxu0 0.0
    %445 = vmatpush1.msra.mxu0 %v418
    %446 = vmatprep.subr.mxu0 0.0
    %447 = vmatpush1.msra.mxu0 %v417
    %448 = vmatprep.subr.mxu0 0.0
    %449 = vmatpush1.msra.mxu0 %v416
    %450 = vmatprep.subr.mxu0 0.0
    %451 = vmatpush1.msra.mxu0 %v415
    %452 = vmatprep.subr.mxu0 0.0
    %453 = vmatpush1.msra.mxu0 %v414
    %454 = vmatprep.subr.mxu0 0.0
    %455 = vmatpush1.msra.mxu0 %v413
    %456 = vmatprep.subr.mxu0 0.0
    %457 = vmatpush1.msra.mxu0 %v412
    %458 = vmatprep.subr.mxu0 0.0
    %459 = vmatpush1.msra.mxu0 %v411
    %460 = vmatprep.subr.mxu0 0.0
    %461 = vmatpush1.msra.mxu0 %v410
    %462 = vmatprep.subr.mxu0 0.0
    %463 = vmatpush1.msra.mxu0 %v409
    %464 = vmatprep.subr.mxu0 0.0
    %465 = vmatpush2.msra.mxu0 0.0
    %466 = vmatprep.subr.mxu0 0.0
    %467 = vmatpush2.msra.mxu0 0.0
    %468 = vmatprep.subr.mxu0 0.0
    %469 = vmatpush2.msra.mxu0 0.0
    %470 = vmatprep.subr.mxu0 0.0
    %471 = vmatpush2.msra.mxu0 0.0
    %472 = vmatprep.subr.mxu0 0.0
    %473 = vmatpush2.msra.mxu0 0.0
    %474 = vmatprep.subr.mxu0 0.0
    %475 = vmatpush2.msra.mxu0 0.0
    %476 = vmatprep.subr.mxu0 0.0
    %477 = vmatpush2.msra.mxu0 0.0
    %478 = vmatprep.subr.mxu0 0.0
    %479 = vmatpush2.msra.mxu0 0.0
    %480 = vmatprep.subr.mxu0 0.0
    %481 = vmatpush2.msra.mxu0 0.0
    %482 = vmatprep.subr.mxu0 0.0
    %483 = vmatpush2.msra.mxu0 0.0
    %484 = vmatprep.subr.mxu0 0.0
    %485 = vmatpush2.msra.mxu0 0.0
    %486 = vmatprep.subr.mxu0 0.0
    %487 = vmatpush2.msra.mxu0 0.0
    %488 = vmatprep.subr.mxu0 0.0
    %489 = vmatpush2.msra.mxu0 0.0
    %490 = vmatprep.subr.mxu0 0.0
    %491 = vmatpush2.msra.mxu0 0.0
    %492 = vmatprep.subr.mxu0 0.0
    %493 = vmatpush2.msra.mxu0 0.0
    %494 = vmatprep.subr.mxu0 0.0
    %495 = vmatpush2.msra.mxu0 0.0
    %496 = vmatprep.mubr.f32.mxu0 0.0
    %497 = vmatmul.mubr.f32.gmra.mxu0 %v408
    %v498 = vpop.f32.mrf.mxu0
    %v499 = vadd.f32 %v430, %v498
    %v500 = vpop.f32.mrf.mxu0
    %501 = vdwg.mxu0
    %v502 = vmax.f32 %v499, 0.0
    %v503 = vld [vmem:[#allocation8] sm:$0xff]
    %v504 = vld [vmem:[#allocation8 + $0x8] sm:$0xff]
    %v505 = vld [vmem:[#allocation8 + $0x10] sm:$0xff]
    %v506 = vld [vmem:[#allocation8 + $0x18] sm:$0xff]
    %v507 = vld [vmem:[#allocation8 + $0x20] sm:$0xff]
    %v508 = vld [vmem:[#allocation8 + $0x28] sm:$0xff]
    %v509 = vld [vmem:[#allocation8 + $0x30] sm:$0xff]
    %v510 = vld [vmem:[#allocation8 + $0x38] sm:$0xff]
    %v511 = vld [vmem:[#allocation8 + $0x40] sm:$0xff]
    %v512 = vld [vmem:[#allocation8 + $0x48] sm:$0xff]
    %v513 = vld [vmem:[#allocation8 + $0x50] sm:$0xff]
    %v514 = vld [vmem:[#allocation8 + $0x58] sm:$0xff]
    %v515 = vld [vmem:[#allocation8 + $0x60] sm:$0xff]
    %v516 = vld [vmem:[#allocation8 + $0x68] sm:$0xff]
    %v517 = vld [vmem:[#allocation8 + $0x70] sm:$0xff]
    %v518 = vld [vmem:[#allocation8 + $0x78] sm:$0xff]
    %v519 = vld [vmem:[%s10] sm:$0x1]
    %v521 = vlaneseq
    %v522 = vshrl.u32 %v521, 7
    %v523 = vsub.s32 0, %v522
    %v524 = vrot.slane %v519, %v523
    %526 = vmatprep.subr.mxu0 0.0
    %527 = vmatpush1.msra.mxu0 %v518
    %528 = vmatprep.subr.mxu0 0.0
    %529 = vmatpush1.msra.mxu0 %v517
    %530 = vmatprep.subr.mxu0 0.0
    %531 = vmatpush1.msra.mxu0 %v516
    %532 = vmatprep.subr.mxu0 0.0
    %533 = vmatpush1.msra.mxu0 %v515
    %534 = vmatprep.subr.mxu0 0.0
    %535 = vmatpush1.msra.mxu0 %v514
    %536 = vmatprep.subr.mxu0 0.0
    %537 = vmatpush1.msra.mxu0 %v513
    %538 = vmatprep.subr.mxu0 0.0
    %539 = vmatpush1.msra.mxu0 %v512
    %540 = vmatprep.subr.mxu0 0.0
    %541 = vmatpush1.msra.mxu0 %v511
    %542 = vmatprep.subr.mxu0 0.0
    %543 = vmatpush1.msra.mxu0 %v510
    %544 = vmatprep.subr.mxu0 0.0
    %545 = vmatpush1.msra.mxu0 %v509
    %546 = vmatprep.subr.mxu0 0.0
    %547 = vmatpush1.msra.mxu0 %v508
    %548 = vmatprep.subr.mxu0 0.0
    %549 = vmatpush1.msra.mxu0 %v507
    %550 = vmatprep.subr.mxu0 0.0
    %551 = vmatpush1.msra.mxu0 %v506
    %552 = vmatprep.subr.mxu0 0.0
    %553 = vmatpush1.msra.mxu0 %v505
    %554 = vmatprep.subr.mxu0 0.0
    %555 = vmatpush1.msra.mxu0 %v504
    %556 = vmatprep.subr.mxu0 0.0
    %557 = vmatpush1.msra.mxu0 %v503
    %558 = vmatprep.subr.mxu0 0.0
    %559 = vmatpush2.msra.mxu0 0.0
    %560 = vmatprep.subr.mxu0 0.0
    %561 = vmatpush2.msra.mxu0 0.0
    %562 = vmatprep.subr.mxu0 0.0
    %563 = vmatpush2.msra.mxu0 0.0
    %564 = vmatprep.subr.mxu0 0.0
    %565 = vmatpush2.msra.mxu0 0.0
    %566 = vmatprep.subr.mxu0 0.0
    %567 = vmatpush2.msra.mxu0 0.0
    %568 = vmatprep.subr.mxu0 0.0
    %569 = vmatpush2.msra.mxu0 0.0
    %570 = vmatprep.subr.mxu0 0.0
    %571 = vmatpush2.msra.mxu0 0.0
    %572 = vmatprep.subr.mxu0 0.0
    %573 = vmatpush2.msra.mxu0 0.0
    %574 = vmatprep.subr.mxu0 0.0
    %575 = vmatpush2.msra.mxu0 0.0
    %576 = vmatprep.subr.mxu0 0.0
    %577 = vmatpush2.msra.mxu0 0.0
    %578 = vmatprep.subr.mxu0 0.0
    %579 = vmatpush2.msra.mxu0 0.0
    %580 = vmatprep.subr.mxu0 0.0
    %581 = vmatpush2.msra.mxu0 0.0
    %582 = vmatprep.subr.mxu0 0.0
    %583 = vmatpush2.msra.mxu0 0.0
    %584 = vmatprep.subr.mxu0 0.0
    %585 = vmatpush2.msra.mxu0 0.0
    %586 = vmatprep.subr.mxu0 0.0
    %587 = vmatpush2.msra.mxu0 0.0
    %588 = vmatprep.subr.mxu0 0.0
    %589 = vmatpush2.msra.mxu0 0.0
    %590 = vmatprep.mubr.f32.mxu0 0.0
    %591 = vmatmul.mubr.f32.gmra.mxu0 %v502
    %v592 = vpop.f32.mrf.mxu0
    %v593 = vadd.f32 %v524, %v592
    %v594 = vpop.f32.mrf.mxu0
    %595 = vdwg.mxu0
    %v596 = vmax.f32 %v593, 0.0
    %v597 = vld [vmem:[#allocation10] sm:$0xff]
    %v598 = vld [vmem:[#allocation10 + $0x8] sm:$0xff]
    %v599 = vld [vmem:[#allocation10 + $0x10] sm:$0xff]
    %v600 = vld [vmem:[#allocation10 + $0x18] sm:$0xff]
    %v601 = vld [vmem:[#allocation10 + $0x20] sm:$0xff]
    %v602 = vld [vmem:[#allocation10 + $0x28] sm:$0xff]
    %v603 = vld [vmem:[#allocation10 + $0x30] sm:$0xff]
    %v604 = vld [vmem:[#allocation10 + $0x38] sm:$0xff]
    %v605 = vld [vmem:[#allocation10 + $0x40] sm:$0xff]
    %v606 = vld [vmem:[#allocation10 + $0x48] sm:$0xff]
    %v607 = vld [vmem:[#allocation10 + $0x50] sm:$0xff]
    %v608 = vld [vmem:[#allocation10 + $0x58] sm:$0xff]
    %v609 = vld [vmem:[#allocation10 + $0x60] sm:$0xff]
    %v610 = vld [vmem:[#allocation10 + $0x68] sm:$0xff]
    %v611 = vld [vmem:[#allocation10 + $0x70] sm:$0xff]
    %v612 = vld [vmem:[#allocation10 + $0x78] sm:$0xff]
    %v613 = vld [vmem:[%s12] sm:$0x1]
    %v615 = vlaneseq
    %v616 = vshrl.u32 %v615, 7
    %v617 = vsub.s32 0, %v616
    %v618 = vrot.slane %v613, %v617
    %620 = vmatprep.subr.mxu0 0.0
    %621 = vmatpush1.msra.mxu0 %v612
    %622 = vmatprep.subr.mxu0 0.0
    %623 = vmatpush1.msra.mxu0 %v611
    %624 = vmatprep.subr.mxu0 0.0
    %625 = vmatpush1.msra.mxu0 %v610
    %626 = vmatprep.subr.mxu0 0.0
    %627 = vmatpush1.msra.mxu0 %v609
    %628 = vmatprep.subr.mxu0 0.0
    %629 = vmatpush1.msra.mxu0 %v608
    %630 = vmatprep.subr.mxu0 0.0
    %631 = vmatpush1.msra.mxu0 %v607
    %632 = vmatprep.subr.mxu0 0.0
    %633 = vmatpush1.msra.mxu0 %v606
    %634 = vmatprep.subr.mxu0 0.0
    %635 = vmatpush1.msra.mxu0 %v605
    %636 = vmatprep.subr.mxu0 0.0
    %637 = vmatpush1.msra.mxu0 %v604
    %638 = vmatprep.subr.mxu0 0.0
    %639 = vmatpush1.msra.mxu0 %v603
    %640 = vmatprep.subr.mxu0 0.0
    %641 = vmatpush1.msra.mxu0 %v602
    %642 = vmatprep.subr.mxu0 0.0
    %643 = vmatpush1.msra.mxu0 %v601
    %644 = vmatprep.subr.mxu0 0.0
    %645 = vmatpush1.msra.mxu0 %v600
    %646 = vmatprep.subr.mxu0 0.0
    %647 = vmatpush1.msra.mxu0 %v599
    %648 = vmatprep.subr.mxu0 0.0
    %649 = vmatpush1.msra.mxu0 %v598
    %650 = vmatprep.subr.mxu0 0.0
    %651 = vmatpush1.msra.mxu0 %v597
    %652 = vmatprep.subr.mxu0 0.0
    %653 = vmatpush2.msra.mxu0 0.0
    %654 = vmatprep.subr.mxu0 0.0
    %655 = vmatpush2.msra.mxu0 0.0
    %656 = vmatprep.subr.mxu0 0.0
    %657 = vmatpush2.msra.mxu0 0.0
    %658 = vmatprep.subr.mxu0 0.0
    %659 = vmatpush2.msra.mxu0 0.0
    %660 = vmatprep.subr.mxu0 0.0
    %661 = vmatpush2.msra.mxu0 0.0
    %662 = vmatprep.subr.mxu0 0.0
    %663 = vmatpush2.msra.mxu0 0.0
    %664 = vmatprep.subr.mxu0 0.0
    %665 = vmatpush2.msra.mxu0 0.0
    %666 = vmatprep.subr.mxu0 0.0
    %667 = vmatpush2.msra.mxu0 0.0
    %668 = vmatprep.subr.mxu0 0.0
    %669 = vmatpush2.msra.mxu0 0.0
    %670 = vmatprep.subr.mxu0 0.0
    %671 = vmatpush2.msra.mxu0 0.0
    %672 = vmatprep.subr.mxu0 0.0
    %673 = vmatpush2.msra.mxu0 0.0
    %674 = vmatprep.subr.mxu0 0.0
    %675 = vmatpush2.msra.mxu0 0.0
    %676 = vmatprep.subr.mxu0 0.0
    %677 = vmatpush2.msra.mxu0 0.0
    %678 = vmatprep.subr.mxu0 0.0
    %679 = vmatpush2.msra.mxu0 0.0
    %680 = vmatprep.subr.mxu0 0.0
    %681 = vmatpush2.msra.mxu0 0.0
    %682 = vmatprep.subr.mxu0 0.0
    %683 = vmatpush2.msra.mxu0 0.0
    %684 = vmatprep.mubr.f32.mxu0 0.0
    %685 = vmatmul.mubr.f32.gmra.mxu0 %v596
    %v686 = vpop.f32.mrf.mxu0
    %v687 = vadd.f32 %v618, %v686
    %v688 = vpop.f32.mrf.mxu0
    %689 = vdwg.mxu0
    %v690 = vmax.f32 %v687, 0.0
    %v691 = vld [vmem:[#allocation11] sm:$0xff]
    %v692 = vld [vmem:[#allocation11 + $0x8] sm:$0xff]
    %v693 = vld [vmem:[#allocation11 + $0x10] sm:$0xff]
    %v694 = vld [vmem:[#allocation11 + $0x18] sm:$0xff]
    %v695 = vld [vmem:[#allocation11 + $0x20] sm:$0xff]
    %v696 = vld [vmem:[#allocation11 + $0x28] sm:$0xff]
    %v697 = vld [vmem:[#allocation11 + $0x30] sm:$0xff]
    %v698 = vld [vmem:[#allocation11 + $0x38] sm:$0xff]
    %v699 = vld [vmem:[#allocation11 + $0x40] sm:$0xff]
    %v700 = vld [vmem:[#allocation11 + $0x48] sm:$0xff]
    %v701 = vld [vmem:[#allocation11 + $0x50] sm:$0xff]
    %v702 = vld [vmem:[#allocation11 + $0x58] sm:$0xff]
    %v703 = vld [vmem:[#allocation11 + $0x60] sm:$0xff]
    %v704 = vld [vmem:[#allocation11 + $0x68] sm:$0xff]
    %v705 = vld [vmem:[#allocation11 + $0x70] sm:$0xff]
    %v706 = vld [vmem:[#allocation11 + $0x78] sm:$0xff]
    %v707 = vld [vmem:[%s14] sm:$0x1]
    %v709 = vlaneseq
    %v710 = vshrl.u32 %v709, 7
    %v711 = vsub.s32 0, %v710
    %v712 = vrot.slane %v707, %v711
    %714 = vmatprep.subr.mxu0 0.0
    %715 = vmatpush1.msra.mxu0 %v706
    %716 = vmatprep.subr.mxu0 0.0
    %717 = vmatpush1.msra.mxu0 %v705
    %718 = vmatprep.subr.mxu0 0.0
    %719 = vmatpush1.msra.mxu0 %v704
    %720 = vmatprep.subr.mxu0 0.0
    %721 = vmatpush1.msra.mxu0 %v703
    %722 = vmatprep.subr.mxu0 0.0
    %723 = vmatpush1.msra.mxu0 %v702
    %724 = vmatprep.subr.mxu0 0.0
    %725 = vmatpush1.msra.mxu0 %v701
    %726 = vmatprep.subr.mxu0 0.0
    %727 = vmatpush1.msra.mxu0 %v700
    %728 = vmatprep.subr.mxu0 0.0
    %729 = vmatpush1.msra.mxu0 %v699
    %730 = vmatprep.subr.mxu0 0.0
    %731 = vmatpush1.msra.mxu0 %v698
    %732 = vmatprep.subr.mxu0 0.0
    %733 = vmatpush1.msra.mxu0 %v697
    %734 = vmatprep.subr.mxu0 0.0
    %735 = vmatpush1.msra.mxu0 %v696
    %736 = vmatprep.subr.mxu0 0.0
    %737 = vmatpush1.msra.mxu0 %v695
    %738 = vmatprep.subr.mxu0 0.0
    %739 = vmatpush1.msra.mxu0 %v694
    %740 = vmatprep.subr.mxu0 0.0
    %741 = vmatpush1.msra.mxu0 %v693
    %742 = vmatprep.subr.mxu0 0.0
    %743 = vmatpush1.msra.mxu0 %v692
    %744 = vmatprep.subr.mxu0 0.0
    %745 = vmatpush1.msra.mxu0 %v691
    %746 = vmatprep.subr.mxu0 0.0
    %747 = vmatpush2.msra.mxu0 0.0
    %748 = vmatprep.subr.mxu0 0.0
    %749 = vmatpush2.msra.mxu0 0.0
    %750 = vmatprep.subr.mxu0 0.0
    %751 = vmatpush2.msra.mxu0 0.0
    %752 = vmatprep.subr.mxu0 0.0
    %753 = vmatpush2.msra.mxu0 0.0
    %754 = vmatprep.subr.mxu0 0.0
    %755 = vmatpush2.msra.mxu0 0.0
    %756 = vmatprep.subr.mxu0 0.0
    %757 = vmatpush2.msra.mxu0 0.0
    %758 = vmatprep.subr.mxu0 0.0
    %759 = vmatpush2.msra.mxu0 0.0
    %760 = vmatprep.subr.mxu0 0.0
    %761 = vmatpush2.msra.mxu0 0.0
    %762 = vmatprep.subr.mxu0 0.0
    %763 = vmatpush2.msra.mxu0 0.0
    %764 = vmatprep.subr.mxu0 0.0
    %765 = vmatpush2.msra.mxu0 0.0
    %766 = vmatprep.subr.mxu0 0.0
    %767 = vmatpush2.msra.mxu0 0.0
    %768 = vmatprep.subr.mxu0 0.0
    %769 = vmatpush2.msra.mxu0 0.0
    %770 = vmatprep.subr.mxu0 0.0
    %771 = vmatpush2.msra.mxu0 0.0
    %772 = vmatprep.subr.mxu0 0.0
    %773 = vmatpush2.msra.mxu0 0.0
    %774 = vmatprep.subr.mxu0 0.0
    %775 = vmatpush2.msra.mxu0 0.0
    %776 = vmatprep.subr.mxu0 0.0
    %777 = vmatpush2.msra.mxu0 0.0
    %778 = vmatprep.mubr.f32.mxu0 0.0
    %779 = vmatmul.mubr.f32.gmra.mxu0 %v690
    %v780 = vpop.f32.mrf.mxu0
    %v781 = vadd.f32 %v712, %v780
    %v782 = vpop.f32.mrf.mxu0
    %783 = vdwg.mxu0
    %784 = vst [vmem:[#allocation13] sm:$0xff] %v781
    // Predicated region
    $region86: #{tpu_custom_call.1} parent=1 // pred_check
      _
    $region87: #{tpu_custom_call.1} parent=1 // pred_check_branch
      %786 = sbr.rel (0) target = $region89
    $region88: #{tpu_custom_call.1} parent=1 // pred_region
      %s788 = ssub.s32 128, 128
      %789 = vsyncadd [#allocation4], %s788
      %s791 = sshll.u32 [#allocation13], 4
      %s792 = int_to_ptr.vmem [resolvable:$true] %s791
      %794 = dma.vmem_to_hbm [thread:$0]  %s792, 128, %s15, [#allocation4]
    $region89: #{tpu_custom_call.1} parent=1 // pred_fallthru
      _
    // Predicated region
    $region90: #{tpu_custom_call.1} parent=1 // pred_check
      _
    $region91: #{tpu_custom_call.1} parent=1 // pred_check_branch
      %796 = sbr.rel (0) target = $region93
    $region92: #{tpu_custom_call.1} parent=1 // pred_region
      %797 = dma.done [#allocation4], 128
    $region93: #{tpu_custom_call.1} parent=1 // pred_fallthru
      _
    %798 = vsyncpa [#allocation3], 1
    %799 = vsyncpa [#allocation6], 1
    %800 = vsyncpa [#allocation9], 1
    %801 = vsyncpa [#allocation12], 1
    %802 = vsyncpa [#allocation4], 1

</llo_original>
